<compile_context>
chip_gen: v5e
topology: v5e:2x2
jax: 0.10.0
libtpu: 0.0.40
codegen_flags: <defaults>
</compile_context>

<pallas_src>
import jax
import jax.numpy as jnp
from jax.experimental import pallas as pl
from jax.experimental.pallas import tpu as pltpu


def _attention_kernel(x_ref, wa_ref, ba_ref, wc_ref, bc_ref,
                      logits_ref, seg_ref, attn_ref):
    # x_ref block: (1, C_in, T); weight blocks: (C_out, C_in); bias: (C_out, 1)
    x = x_ref[0].astype(jnp.float32)                       # (C_in, T)
    wa = wa_ref[...].astype(jnp.float32)                   # (C_out, C_in)
    wc = wc_ref[...].astype(jnp.float32)
    ba = ba_ref[...].astype(jnp.float32)                   # (C_out, 1)
    bc = bc_ref[...].astype(jnp.float32)

    # Attention branch: Conv1d(k=1) -> tanh -> softmax over the time (lane) axis.
    a_pre = jnp.dot(wa, x, preferred_element_type=jnp.float32) + ba   # (C_out, T)
    a_tanh = jnp.tanh(a_pre)
    a_max = jnp.max(a_tanh, axis=-1, keepdims=True)
    a_exp = jnp.exp(a_tanh - a_max)
    attn = a_exp / jnp.sum(a_exp, axis=-1, keepdims=True)

    # Classification branch: Conv1d(k=1).
    seg = jnp.dot(wc, x, preferred_element_type=jnp.float32) + bc     # (C_out, T)

    # Attention-weighted pooling over time.
    logits = jnp.sum(seg * attn, axis=-1, keepdims=True)              # (C_out, 1)

    attn_ref[0] = attn.astype(attn_ref.dtype)
    seg_ref[0] = seg.astype(seg_ref.dtype)
    logits_ref[0] = logits.astype(logits_ref.dtype)


def attention_pallas(x, w_attn, b_attn, w_cla, b_cla):
    """Pallas forward of the Attention module.

    x      : (B, C_in, T)
    w_attn : (C_out, C_in, 1)  Conv1d kernel_size=1 weight
    b_attn : (C_out,)
    w_cla  : (C_out, C_in, 1)
    b_cla  : (C_out,)
    returns dict with 'logits' (B, C_out), 'segmentwise_logits' (B, C_out, T),
    'attention' (B, C_out, T).
    """
    B, C_in, T = x.shape
    C_out = w_attn.shape[0]
    dtype = x.dtype

    wa2 = w_attn.reshape(C_out, C_in)
    wc2 = w_cla.reshape(C_out, C_in)
    ba2 = b_attn.reshape(C_out, 1)
    bc2 = b_cla.reshape(C_out, 1)

    row3 = lambda b: (b, 0, 0)     # per-sample row
    const2 = lambda b: (0, 0)      # weights/biases: same block every step -> stay resident

    grid_spec = pl.GridSpec(
        grid=(B,),
        in_specs=[
            pl.BlockSpec((1, C_in, T), row3),        # x[b]
            pl.BlockSpec((C_out, C_in), const2),     # W_attn
            pl.BlockSpec((C_out, 1), const2),        # b_attn
            pl.BlockSpec((C_out, C_in), const2),     # W_cla
            pl.BlockSpec((C_out, 1), const2),        # b_cla
        ],
        out_specs=[
            pl.BlockSpec((1, C_out, 1), row3),       # logits[b] (as column)
            pl.BlockSpec((1, C_out, T), row3),       # segmentwise_logits[b]
            pl.BlockSpec((1, C_out, T), row3),       # attention[b]
        ],
    )

    logits3, seg, attn = pl.pallas_call(
        _attention_kernel,
        grid_spec=grid_spec,
        out_shape=(
            jax.ShapeDtypeStruct((B, C_out, 1), dtype),
            jax.ShapeDtypeStruct((B, C_out, T), dtype),
            jax.ShapeDtypeStruct((B, C_out, T), dtype),
        ),
        compiler_params=pltpu.CompilerParams(
            dimension_semantics=("parallel",)),
    )(x, wa2, ba2, wc2, bc2)

    return {
        'logits': logits3.reshape(B, C_out),
        'segmentwise_logits': seg,
        'attention': attn,
    }


def attention_ref(x, w_attn, b_attn, w_cla, b_cla):
    """Pure-JAX reference with the same semantics as the torch forward."""
    wa = w_attn.reshape(w_attn.shape[0], w_attn.shape[1])
    wc = w_cla.reshape(w_cla.shape[0], w_cla.shape[1])
    a_pre = jnp.einsum('oc,bct->bot', wa, x) + b_attn[None, :, None]
    attn = jax.nn.softmax(jnp.tanh(a_pre), axis=-1)
    seg = jnp.einsum('oc,bct->bot', wc, x) + b_cla[None, :, None]
    logits = jnp.sum(seg * attn, axis=-1)
    return logits, seg, attn


if __name__ == "__main__":
    key = jax.random.PRNGKey(0)
    k_x, k_wa, k_ba, k_wc, k_bc = jax.random.split(key, 5)

    B, C_in, C_out, T = 2, 32, 8, 128

    x = jax.random.normal(k_x, (B, C_in, T), dtype=jnp.float32)
    # Conv1d(kernel_size=1) parameters, PyTorch layout (C_out, C_in, 1) / (C_out,)
    scale = 1.0 / jnp.sqrt(C_in)
    w_attn = scale * jax.random.normal(k_wa, (C_out, C_in, 1), dtype=jnp.float32)
    b_attn = scale * jax.random.normal(k_ba, (C_out,), dtype=jnp.float32)
    w_cla = scale * jax.random.normal(k_wc, (C_out, C_in, 1), dtype=jnp.float32)
    b_cla = scale * jax.random.normal(k_bc, (C_out,), dtype=jnp.float32)

    out = attention_pallas(x, w_attn, b_attn, w_cla, b_cla)
    jax.block_until_ready(out)

    logits_ref, seg_ref, attn_ref = attention_ref(x, w_attn, b_attn, w_cla, b_cla)

    assert jnp.allclose(out['logits'], logits_ref, atol=1e-4, rtol=1e-4)
    assert jnp.allclose(out['segmentwise_logits'], seg_ref, atol=1e-4, rtol=1e-4)
    assert jnp.allclose(out['attention'], attn_ref, atol=1e-5, rtol=1e-4)
    print("KERNEL_OK")
</pallas_src>

<mosaic_0001>
module attributes {stable_mosaic.version = 11 : i64} {
  func.func @_attention_kernel(%arg0: i32, %arg1: memref<1x32x128xf32, #tpu.memory_space<vmem>>, %arg2: memref<8x32xf32, #tpu.memory_space<vmem>>, %arg3: memref<8x1xf32, #tpu.memory_space<vmem>>, %arg4: memref<8x32xf32, #tpu.memory_space<vmem>>, %arg5: memref<8x1xf32, #tpu.memory_space<vmem>>, %arg6: memref<1x8x1xf32, #tpu.memory_space<vmem>>, %arg7: memref<1x8x128xf32, #tpu.memory_space<vmem>>, %arg8: memref<1x8x128xf32, #tpu.memory_space<vmem>>) attributes {dimension_semantics = [#tpu.dimension_semantics<parallel>], iteration_bounds = array<i64: 2>, scalar_prefetch = 0 : i64, scratch_operands = 0 : i64, tpu.core_type = #tpu.core_type<tc>, window_params = [{transform_indices = @transform_0, window_bounds = array<i64: 1, 32, 128>}, {pipeline_mode = #tpu.pipeline_mode<synchronous>, transform_indices = @transform_1, window_bounds = array<i64: 8, 32>}, {pipeline_mode = #tpu.pipeline_mode<synchronous>, transform_indices = @transform_2, window_bounds = array<i64: 8, 1>}, {pipeline_mode = #tpu.pipeline_mode<synchronous>, transform_indices = @transform_3, window_bounds = array<i64: 8, 32>}, {pipeline_mode = #tpu.pipeline_mode<synchronous>, transform_indices = @transform_4, window_bounds = array<i64: 8, 1>}, {transform_indices = @transform_5, window_bounds = array<i64: 1, 8, 1>}, {transform_indices = @transform_6, window_bounds = array<i64: 1, 8, 128>}, {transform_indices = @transform_7, window_bounds = array<i64: 1, 8, 128>}]} {
    %c0 = arith.constant 0 : index
    %c0_0 = arith.constant 0 : index
    %c0_1 = arith.constant 0 : index
    %0 = vector.load %arg1[%c0, %c0_0, %c0_1] : memref<1x32x128xf32, #tpu.memory_space<vmem>>, vector<1x32x128xf32>
    %1 = vector.shape_cast %0 : vector<1x32x128xf32> to vector<32x128xf32>
    %c0_2 = arith.constant 0 : index
    %c0_3 = arith.constant 0 : index
    %2 = vector.load %arg2[%c0_2, %c0_3] : memref<8x32xf32, #tpu.memory_space<vmem>>, vector<8x32xf32>
    %c0_4 = arith.constant 0 : index
    %c0_5 = arith.constant 0 : index
    %3 = vector.load %arg4[%c0_4, %c0_5] : memref<8x32xf32, #tpu.memory_space<vmem>>, vector<8x32xf32>
    %c0_6 = arith.constant 0 : index
    %c0_7 = arith.constant 0 : index
    %4 = vector.load %arg3[%c0_6, %c0_7] : memref<8x1xf32, #tpu.memory_space<vmem>>, vector<8x1xf32>
    %c0_8 = arith.constant 0 : index
    %c0_9 = arith.constant 0 : index
    %5 = vector.load %arg5[%c0_8, %c0_9] : memref<8x1xf32, #tpu.memory_space<vmem>>, vector<8x1xf32>
    %cst = arith.constant dense<0.000000e+00> : vector<8x128xf32>
    %6 = tpu.matmul %2, %1, %cst {dimension_numbers = #tpu.dot_dimension_numbers<[1], [0], [0], [1], [0, 0, 1, 1], [], []>} : vector<8x32xf32>, vector<32x128xf32>, vector<8x128xf32> -> vector<8x128xf32>
    %7 = vector.broadcast %4 : vector<8x1xf32> to vector<8x128xf32>
    %8 = arith.addf %6, %7 : vector<8x128xf32>
    %9 = math.tanh %8 : vector<8x128xf32>
    %cst_10 = arith.constant dense<0xFF800000> : vector<8xf32>
    %10 = vector.multi_reduction <maximumf>, %9, %cst_10 [1] : vector<8x128xf32> to vector<8xf32>
    %11 = vector.shape_cast %10 : vector<8xf32> to vector<8x1xf32>
    %12 = vector.broadcast %11 : vector<8x1xf32> to vector<8x128xf32>
    %13 = arith.subf %9, %12 : vector<8x128xf32>
    %14 = math.exp %13 : vector<8x128xf32>
    %cst_11 = arith.constant dense<0.000000e+00> : vector<8xf32>
    %15 = vector.multi_reduction <add>, %14, %cst_11 [1] : vector<8x128xf32> to vector<8xf32>
    %16 = vector.shape_cast %15 : vector<8xf32> to vector<8x1xf32>
    %17 = vector.broadcast %16 : vector<8x1xf32> to vector<8x128xf32>
    %18 = arith.divf %14, %17 : vector<8x128xf32>
    %cst_12 = arith.constant dense<0.000000e+00> : vector<8x128xf32>
    %19 = tpu.matmul %3, %1, %cst_12 {dimension_numbers = #tpu.dot_dimension_numbers<[1], [0], [0], [1], [0, 0, 1, 1], [], []>} : vector<8x32xf32>, vector<32x128xf32>, vector<8x128xf32> -> vector<8x128xf32>
    %20 = vector.broadcast %5 : vector<8x1xf32> to vector<8x128xf32>
    %21 = arith.addf %19, %20 : vector<8x128xf32>
    %22 = arith.mulf %21, %18 : vector<8x128xf32>
    %cst_13 = arith.constant dense<0.000000e+00> : vector<8xf32>
    %23 = vector.multi_reduction <add>, %22, %cst_13 [1] : vector<8x128xf32> to vector<8xf32>
    %24 = vector.shape_cast %23 : vector<8xf32> to vector<8x1xf32>
    %c0_14 = arith.constant 0 : index
    %c0_15 = arith.constant 0 : index
    %c0_16 = arith.constant 0 : index
    %25 = vector.load %arg8[%c0_14, %c0_15, %c0_16] : memref<1x8x128xf32, #tpu.memory_space<vmem>>, vector<1x8x128xf32>
    %26 = vector.shape_cast %25 : vector<1x8x128xf32> to vector<8x128xf32>
    %27 = vector.shape_cast %18 : vector<8x128xf32> to vector<1x8x128xf32>
    tpu.vector_store %arg8[%c0_14, %c0_15, %c0_16], %27 {strides = array<i32>} : memref<1x8x128xf32, #tpu.memory_space<vmem>>, vector<1x8x128xf32>,
    %c0_17 = arith.constant 0 : index
    %c0_18 = arith.constant 0 : index
    %c0_19 = arith.constant 0 : index
    %28 = vector.load %arg7[%c0_17, %c0_18, %c0_19] : memref<1x8x128xf32, #tpu.memory_space<vmem>>, vector<1x8x128xf32>
    %29 = vector.shape_cast %28 : vector<1x8x128xf32> to vector<8x128xf32>
    %30 = vector.shape_cast %21 : vector<8x128xf32> to vector<1x8x128xf32>
    tpu.vector_store %arg7[%c0_17, %c0_18, %c0_19], %30 {strides = array<i32>} : memref<1x8x128xf32, #tpu.memory_space<vmem>>, vector<1x8x128xf32>,
    %c0_20 = arith.constant 0 : index
    %c0_21 = arith.constant 0 : index
    %c0_22 = arith.constant 0 : index
    %31 = vector.load %arg6[%c0_20, %c0_21, %c0_22] : memref<1x8x1xf32, #tpu.memory_space<vmem>>, vector<1x8x1xf32>
    %32 = vector.shape_cast %31 : vector<1x8x1xf32> to vector<8x1xf32>
    %33 = vector.shape_cast %24 : vector<8x1xf32> to vector<1x8x1xf32>
    tpu.vector_store %arg6[%c0_20, %c0_21, %c0_22], %33 {strides = array<i32>} : memref<1x8x1xf32, #tpu.memory_space<vmem>>, vector<1x8x1xf32>,
    return
  }
  func.func @transform_0(%arg0: i32) -> (i32, i32, i32) {
    %c0_i32 = arith.constant 0 : i32
    %c0_i32_0 = arith.constant 0 : i32
    %c0_i32_1 = arith.constant 0 : i32
    return %arg0, %c0_i32, %c0_i32_0 : i32, i32, i32
  }
  func.func @transform_1(%arg0: i32) -> (i32, i32) {
    %c0_i32 = arith.constant 0 : i32
    %c0_i32_0 = arith.constant 0 : i32
    %c0_i32_1 = arith.constant 0 : i32
    return %c0_i32, %c0_i32_0 : i32, i32
  }
  func.func @transform_2(%arg0: i32) -> (i32, i32) {
    %c0_i32 = arith.constant 0 : i32
    %c0_i32_0 = arith.constant 0 : i32
    %c0_i32_1 = arith.constant 0 : i32
    return %c0_i32, %c0_i32_0 : i32, i32
  }
  func.func @transform_3(%arg0: i32) -> (i32, i32) {
    %c0_i32 = arith.constant 0 : i32
    %c0_i32_0 = arith.constant 0 : i32
    %c0_i32_1 = arith.constant 0 : i32
    return %c0_i32, %c0_i32_0 : i32, i32
  }
  func.func @transform_4(%arg0: i32) -> (i32, i32) {
    %c0_i32 = arith.constant 0 : i32
    %c0_i32_0 = arith.constant 0 : i32
    %c0_i32_1 = arith.constant 0 : i32
    return %c0_i32, %c0_i32_0 : i32, i32
  }
  func.func @transform_5(%arg0: i32) -> (i32, i32, i32) {
    %c0_i32 = arith.constant 0 : i32
    %c0_i32_0 = arith.constant 0 : i32
    %c0_i32_1 = arith.constant 0 : i32
    return %arg0, %c0_i32, %c0_i32_0 : i32, i32, i32
  }
  func.func @transform_6(%arg0: i32) -> (i32, i32, i32) {
    %c0_i32 = arith.constant 0 : i32
    %c0_i32_0 = arith.constant 0 : i32
    %c0_i32_1 = arith.constant 0 : i32
    return %arg0, %c0_i32, %c0_i32_0 : i32, i32, i32
  }
  func.func @transform_7(%arg0: i32) -> (i32, i32, i32) {
    %c0_i32 = arith.constant 0 : i32
    %c0_i32_0 = arith.constant 0 : i32
    %c0_i32_1 = arith.constant 0 : i32
    return %arg0, %c0_i32, %c0_i32_0 : i32, i32, i32
  }
}

</mosaic_0001>

<llo_original>
// kernel: tpu_custom_call.1
$region0: #{tpu_custom_call.1}
  #allocation0 [shape = 'u32[]', space=smem, size = 0x4, offset = 0x4, fixed_abs, tag = 'smem constant byte address 0x4 - core index']
  #allocation1 [shape = 'u32[72,128]{1,0:T(1,128)}', space=vmem, size = 0x9000, scoped, tag = 'internal scratch']
  %s0 = inlined_call_operand.hbm [shape: f32[2,32,128], index: 0, kind: input, shape index: {}]
  %s1 = inlined_call_operand.vmem [shape: f32[8,32], index: 1, kind: input, shape index: {}]
  %s2 = inlined_call_operand.vmem [shape: f32[8,1], index: 2, kind: input, shape index: {}]
  %s3 = inlined_call_operand.vmem [shape: f32[8,32], index: 3, kind: input, shape index: {}]
  %s4 = inlined_call_operand.vmem [shape: f32[8,1], index: 4, kind: input, shape index: {}]
  %s5 = inlined_call_operand.vmem [shape: f32[2,8,1], index: 5, kind: output, shape index: {0}]
  %s6 = inlined_call_operand.hbm [shape: f32[2,8,128], index: 6, kind: output, shape index: {1}]
  %s7 = inlined_call_operand.hbm [shape: f32[2,8,128], index: 7, kind: output, shape index: {2}]
  %8 = xla_tuple %s5, %s6, %s7
  %s9 = sld [smem:[#allocation0]]
  $region73: #{tpu_custom_call.1} parent=0
    _
  %s11 = ssub.s32 1, %s9
  %s12 = scalar_select 0, %s11, %s9
  $region1: #{tpu_custom_call.1} parent=0
    #allocation2 [shape = 'u8[32768]{0}', space=vmem, size = 0x8000, scoped, tag = 'input window, operand 0']
    #allocation3 [shape = 's32[2]{0}', space=sflag, size = 0x8, scoped, tag = 'scoped memory for tpu_custom_call.1']
    #allocation4 [shape = 's32[2]{0}', space=sflag, size = 0x8, scoped, tag = 'scoped memory for tpu_custom_call.1']
    #allocation5 [shape = 'u8[8192]{0}', space=vmem, size = 0x2000, scoped, tag = 'output window, operand 1']
    #allocation6 [shape = 'u8[8192]{0}', space=vmem, size = 0x2000, scoped, tag = 'output window, operand 2']
    #allocation7 [shape = 's32[2]{0}', space=sflag, size = 0x8, scoped, tag = 'scoped memory for tpu_custom_call.1']
    %13 = vsyncpa [#allocation3], 0
    %s14 = scalar_lea.sflag [#allocation3], 1
    %15 = vsyncpa %s14, 0
    %16 = vsyncpa [#allocation4], 0
    %s17 = scalar_lea.sflag [#allocation4], 1
    %18 = vsyncpa %s17, 0
    %19 = vsyncpa [#allocation7], 0
    %s20 = scalar_lea.sflag [#allocation7], 1
    %21 = vsyncpa %s20, 0
    loop: start=0, step=1, limit=4
    $region2: #{tpu_custom_call.1} parent=1 // loop_pre_header
      _
    $region3: #{tpu_custom_call.1} parent=1 // loop_header
      %s23 = sphi 0, %s27
      %p24 = scmp.ge.s32.totalorder %s23, 4
      %s33 = sphi 0, %s35
      %s36 = sphi 0, %s33
      %s37 = sphi 0, %s36
      %s53 = sphi 0, %s37
      %s57 = sphi 0, %s57
      %s59 = sphi 0, %s57
      %s60 = sphi 0, %s59
      %s74 = sphi 0, %s60
      %s78 = sphi 0, %s78
      %s80 = sphi 0, %s78
      %s81 = sphi 0, %s80
      %s95 = sphi 0, %s81
      %s99 = sphi 0, %s99
      %s101 = sphi 0, %s99
      %s102 = sphi 0, %s101
      %s116 = sphi 0, %s102
      %s120 = sphi 0, %s120
      %s122 = sphi 0, %s120
      %s123 = sphi 0, %s122
      %s137 = sphi 0, %s123
      %s143 = sphi 0, %s145
      %s146 = sphi 0, %s143
      %s147 = sphi 0, %s146
      %s163 = sphi 0, %s147
      %s169 = sphi 0, %s171
      %s172 = sphi 0, %s169
      %s173 = sphi 0, %s172
      %s189 = sphi 0, %s173
      %s195 = sphi 0, %s197
      %s198 = sphi 0, %s195
      %s199 = sphi 0, %s198
      %s215 = sphi 0, %s199
    $region4: #{tpu_custom_call.1} parent=1 // loop_header_branch
      %26 = sbr.rel (%p24) target = $region8
    $region5: #{tpu_custom_call.1} parent=1 // loop_body
      %s28 = ssub.s32 %s23, 1
      %s29 = ssub.s32 %s23, 2
      %s30 = sadd.s32 %s23, 1
      %s31 = ssub.s32 %s23, %s30
      %p32 = scmp.eq.s32.totalorder %s31, 0
      %s34 = sadd.s32 %s33, 1
      %s35 = scalar_select %p32, %s33, %s34
      %p38 = pneg %p32
      %p39 = scmp.eq.s32.totalorder %s23, 1
      %p40 = por %p38, %p39
      %p41 = scmp.ne.s32.totalorder %s33, %s36
      %p42 = scmp.eq.s32.totalorder %s23, 0
      %p43 = por %p41, %p42
      %p44 = scmp.ne.s32.totalorder %s33, %s36
      %p45 = scmp.eq.s32.totalorder %s28, 1
      %p46 = por %p44, %p45
      %p47 = scmp.ne.s32.totalorder %s36, %s37
      %p48 = scmp.eq.s32.totalorder %s28, 0
      %p49 = por %p47, %p48
      %p50 = scmp.ne.s32.totalorder %s36, %s37
      %p51 = scmp.eq.s32.totalorder %s29, 1
      %p52 = por %p50, %p51
      %p54 = scmp.ne.s32.totalorder %s37, %s53
      %p55 = scmp.eq.s32.totalorder %s29, 0
      %p56 = por %p54, %p55
      %s58 = sadd.s32 %s57, 1
      %p61 = scmp.eq.s32.totalorder %s23, 1
      %p62 = scmp.ne.s32.totalorder %s57, %s59
      %p63 = scmp.eq.s32.totalorder %s23, 0
      %p64 = por %p62, %p63
      %p65 = scmp.ne.s32.totalorder %s57, %s59
      %p66 = scmp.eq.s32.totalorder %s28, 1
      %p67 = por %p65, %p66
      %p68 = scmp.ne.s32.totalorder %s59, %s60
      %p69 = scmp.eq.s32.totalorder %s28, 0
      %p70 = por %p68, %p69
      %p71 = scmp.ne.s32.totalorder %s59, %s60
      %p72 = scmp.eq.s32.totalorder %s29, 1
      %p73 = por %p71, %p72
      %p75 = scmp.ne.s32.totalorder %s60, %s74
      %p76 = scmp.eq.s32.totalorder %s29, 0
      %p77 = por %p75, %p76
      %s79 = sadd.s32 %s78, 1
      %p82 = scmp.eq.s32.totalorder %s23, 1
      %p83 = scmp.ne.s32.totalorder %s78, %s80
      %p84 = scmp.eq.s32.totalorder %s23, 0
      %p85 = por %p83, %p84
      %p86 = scmp.ne.s32.totalorder %s78, %s80
      %p87 = scmp.eq.s32.totalorder %s28, 1
      %p88 = por %p86, %p87
      %p89 = scmp.ne.s32.totalorder %s80, %s81
      %p90 = scmp.eq.s32.totalorder %s28, 0
      %p91 = por %p89, %p90
      %p92 = scmp.ne.s32.totalorder %s80, %s81
      %p93 = scmp.eq.s32.totalorder %s29, 1
      %p94 = por %p92, %p93
      %p96 = scmp.ne.s32.totalorder %s81, %s95
      %p97 = scmp.eq.s32.totalorder %s29, 0
      %p98 = por %p96, %p97
      %s100 = sadd.s32 %s99, 1
      %p103 = scmp.eq.s32.totalorder %s23, 1
      %p104 = scmp.ne.s32.totalorder %s99, %s101
      %p105 = scmp.eq.s32.totalorder %s23, 0
      %p106 = por %p104, %p105
      %p107 = scmp.ne.s32.totalorder %s99, %s101
      %p108 = scmp.eq.s32.totalorder %s28, 1
      %p109 = por %p107, %p108
      %p110 = scmp.ne.s32.totalorder %s101, %s102
      %p111 = scmp.eq.s32.totalorder %s28, 0
      %p112 = por %p110, %p111
      %p113 = scmp.ne.s32.totalorder %s101, %s102
      %p114 = scmp.eq.s32.totalorder %s29, 1
      %p115 = por %p113, %p114
      %p117 = scmp.ne.s32.totalorder %s102, %s116
      %p118 = scmp.eq.s32.totalorder %s29, 0
      %p119 = por %p117, %p118
      %s121 = sadd.s32 %s120, 1
      %p124 = scmp.eq.s32.totalorder %s23, 1
      %p125 = scmp.ne.s32.totalorder %s120, %s122
      %p126 = scmp.eq.s32.totalorder %s23, 0
      %p127 = por %p125, %p126
      %p128 = scmp.ne.s32.totalorder %s120, %s122
      %p129 = scmp.eq.s32.totalorder %s28, 1
      %p130 = por %p128, %p129
      %p131 = scmp.ne.s32.totalorder %s122, %s123
      %p132 = scmp.eq.s32.totalorder %s28, 0
      %p133 = por %p131, %p132
      %p134 = scmp.ne.s32.totalorder %s122, %s123
      %p135 = scmp.eq.s32.totalorder %s29, 1
      %p136 = por %p134, %p135
      %p138 = scmp.ne.s32.totalorder %s123, %s137
      %p139 = scmp.eq.s32.totalorder %s29, 0
      %p140 = por %p138, %p139
      %s141 = ssub.s32 %s23, %s30
      %p142 = scmp.eq.s32.totalorder %s141, 0
      %s144 = sadd.s32 %s143, 1
      %s145 = scalar_select %p142, %s143, %s144
      %p148 = pneg %p142
      %p149 = scmp.eq.s32.totalorder %s23, 1
      %p150 = por %p148, %p149
      %p151 = scmp.ne.s32.totalorder %s143, %s146
      %p152 = scmp.eq.s32.totalorder %s23, 0
      %p153 = por %p151, %p152
      %p154 = scmp.ne.s32.totalorder %s143, %s146
      %p155 = scmp.eq.s32.totalorder %s28, 1
      %p156 = por %p154, %p155
      %p157 = scmp.ne.s32.totalorder %s146, %s147
      %p158 = scmp.eq.s32.totalorder %s28, 0
      %p159 = por %p157, %p158
      %p160 = scmp.ne.s32.totalorder %s146, %s147
      %p161 = scmp.eq.s32.totalorder %s29, 1
      %p162 = por %p160, %p161
      %p164 = scmp.ne.s32.totalorder %s147, %s163
      %p165 = scmp.eq.s32.totalorder %s29, 0
      %p166 = por %p164, %p165
      %s167 = ssub.s32 %s23, %s30
      %p168 = scmp.eq.s32.totalorder %s167, 0
      %s170 = sadd.s32 %s169, 1
      %s171 = scalar_select %p168, %s169, %s170
      %p174 = pneg %p168
      %p175 = scmp.eq.s32.totalorder %s23, 1
      %p176 = por %p174, %p175
      %p177 = scmp.ne.s32.totalorder %s169, %s172
      %p178 = scmp.eq.s32.totalorder %s23, 0
      %p179 = por %p177, %p178
      %p180 = scmp.ne.s32.totalorder %s169, %s172
      %p181 = scmp.eq.s32.totalorder %s28, 1
      %p182 = por %p180, %p181
      %p183 = scmp.ne.s32.totalorder %s172, %s173
      %p184 = scmp.eq.s32.totalorder %s28, 0
      %p185 = por %p183, %p184
      %p186 = scmp.ne.s32.totalorder %s172, %s173
      %p187 = scmp.eq.s32.totalorder %s29, 1
      %p188 = por %p186, %p187
      %p190 = scmp.ne.s32.totalorder %s173, %s189
      %p191 = scmp.eq.s32.totalorder %s29, 0
      %p192 = por %p190, %p191
      %s193 = ssub.s32 %s23, %s30
      %p194 = scmp.eq.s32.totalorder %s193, 0
      %s196 = sadd.s32 %s195, 1
      %s197 = scalar_select %p194, %s195, %s196
      %p200 = pneg %p194
      %p201 = scmp.eq.s32.totalorder %s23, 1
      %p202 = por %p200, %p201
      %p203 = scmp.ne.s32.totalorder %s195, %s198
      %p204 = scmp.eq.s32.totalorder %s23, 0
      %p205 = por %p203, %p204
      %p206 = scmp.ne.s32.totalorder %s195, %s198
      %p207 = scmp.eq.s32.totalorder %s28, 1
      %p208 = por %p206, %p207
      %p209 = scmp.ne.s32.totalorder %s198, %s199
      %p210 = scmp.eq.s32.totalorder %s28, 0
      %p211 = por %p209, %p210
      %p212 = scmp.ne.s32.totalorder %s198, %s199
      %p213 = scmp.eq.s32.totalorder %s29, 1
      %p214 = por %p212, %p213
      %p216 = scmp.ne.s32.totalorder %s199, %s215
      %p217 = scmp.eq.s32.totalorder %s29, 0
      %p218 = por %p216, %p217
      %p219 = scmp.le.s32.totalorder 1, %s23
      %p220 = scmp.lt.s32.totalorder %s23, 3
      %p221 = pnand %p219, %p220
      %p222 = pneg %p221
      // Predicated region
      $region9: #{tpu_custom_call.1} parent=5 // pred_check
        _
      $region10: #{tpu_custom_call.1} parent=5 // pred_check_branch
        %224 = sbr.rel (%p221) target = $region12
      $region11: #{tpu_custom_call.1} parent=5 // pred_region
        %s225 = ssub.s32 %s23, 1
        // Predicated region
        $region13: #{tpu_custom_call.1} parent=11 // pred_check
          %p226 = pneg %p70
        $region14: #{tpu_custom_call.1} parent=11 // pred_check_branch
          %228 = sbr.rel (%p226) target = $region16
        $region15: #{tpu_custom_call.1} parent=11 // pred_region
          _
        $region16: #{tpu_custom_call.1} parent=11 // pred_fallthru
          _
        // Predicated region
        $region17: #{tpu_custom_call.1} parent=11 // pred_check
          %p229 = pneg %p91
        $region18: #{tpu_custom_call.1} parent=11 // pred_check_branch
          %231 = sbr.rel (%p229) target = $region20
        $region19: #{tpu_custom_call.1} parent=11 // pred_region
          _
        $region20: #{tpu_custom_call.1} parent=11 // pred_fallthru
          _
        // Predicated region
        $region21: #{tpu_custom_call.1} parent=11 // pred_check
          %p232 = pneg %p112
        $region22: #{tpu_custom_call.1} parent=11 // pred_check_branch
          %234 = sbr.rel (%p232) target = $region24
        $region23: #{tpu_custom_call.1} parent=11 // pred_region
          _
        $region24: #{tpu_custom_call.1} parent=11 // pred_fallthru
          _
        // Predicated region
        $region25: #{tpu_custom_call.1} parent=11 // pred_check
          %p235 = pneg %p133
        $region26: #{tpu_custom_call.1} parent=11 // pred_check_branch
          %237 = sbr.rel (%p235) target = $region28
        $region27: #{tpu_custom_call.1} parent=11 // pred_region
          _
        $region28: #{tpu_custom_call.1} parent=11 // pred_fallthru
          _
      $region12: #{tpu_custom_call.1} parent=5 // pred_fallthru
        _
      %p238 = scmp.lt.s32.totalorder %s23, 2
      // Predicated region
      $region29: #{tpu_custom_call.1} parent=5 // pred_check
        %p239 = pneg %p238
      $region30: #{tpu_custom_call.1} parent=5 // pred_check_branch
        %241 = sbr.rel (%p239) target = $region32
      $region31: #{tpu_custom_call.1} parent=5 // pred_region
        // Predicated region
        $region33: #{tpu_custom_call.1} parent=31 // pred_check
          %p242 = pneg %p43
        $region34: #{tpu_custom_call.1} parent=31 // pred_check_branch
          %244 = sbr.rel (%p242) target = $region36
        $region35: #{tpu_custom_call.1} parent=31 // pred_region
          %s245 = sand.u32 %s33, 1
          %s246 = scalar_lea.sflag [#allocation3], %s245
          %s247 = sand.u32 %s33, 1
          %s248 = smul.addr %s247, 32
          %s249 = scalar_lea.vmem [#allocation2], %s248
          %251 = vsyncadd %s246, 0
          %s252 = smul.addr %s23, 4
          %s253 = smul.addr %s252, 8
          %s254 = scalar_lea.hbm %s0, %s253
          %s255 = sshll.u32 %s254, 4
          %s256 = int_to_ptr.hbm [resolvable:$true] %s255
          %s257 = sshll.u32 %s249, 4
          %s258 = int_to_ptr.vmem [resolvable:$true] %s257
          %263 = dma.hbm_to_vmem [thread:$0]  %s256, 512, %s258, %s246, 128, 128, 8
        $region36: #{tpu_custom_call.1} parent=31 // pred_fallthru
          _
      $region32: #{tpu_custom_call.1} parent=5 // pred_fallthru
        _
      %p264 = scmp.le.s32.totalorder 1, %s23
      %p265 = scmp.lt.s32.totalorder %s23, 3
      %p266 = pnand %p264, %p265
      %p267 = pneg %p266
      // Predicated region
      $region37: #{tpu_custom_call.1} parent=5 // pred_check
        _
      $region38: #{tpu_custom_call.1} parent=5 // pred_check_branch
        %269 = sbr.rel (%p266) target = $region40
      $region39: #{tpu_custom_call.1} parent=5 // pred_region
        %s270 = ssub.s32 %s23, 1
        %s271 = sand.u32 %s36, 1
        %s272 = scalar_lea.sflag [#allocation3], %s271
        %s273 = sand.u32 %s36, 1
        %s274 = smul.addr %s273, 32
        %s275 = scalar_lea.vmem [#allocation2], %s274
        // Predicated region
        $region41: #{tpu_custom_call.1} parent=39 // pred_check
          %p276 = pneg %p49
        $region42: #{tpu_custom_call.1} parent=39 // pred_check_branch
          %278 = sbr.rel (%p276) target = $region44
        $region43: #{tpu_custom_call.1} parent=39 // pred_region
          %280 = dma.done %s272, 512
        $region44: #{tpu_custom_call.1} parent=39 // pred_fallthru
          _
        %s281 = sand.u32 %s36, 1
        %s282 = scalar_lea.sflag [#allocation3], %s281
        %s283 = sand.u32 %s36, 1
        %s284 = smul.addr %s283, 32
        %s285 = scalar_lea.vmem [#allocation2], %s284
        %p286 = pneg %p49
        %p287 = pneg %p46
        %p288 = pneg %p70
        %p289 = pneg %p67
        %p290 = pneg %p91
        %p291 = pneg %p88
        %p292 = pneg %p112
        %p293 = pneg %p109
        %p294 = pneg %p133
        %p295 = pneg %p130
        %p296 = pneg %p159
        %p297 = pneg %p156
        %p298 = scmp.lt.s32.totalorder %s28, 1
        %s299 = scalar_select %p298, %s28, 1
        %s300 = smul.addr %s299, 8
        %s301 = scalar_lea.vmem %s5, %s300
        %p302 = pneg %p185
        %p303 = pneg %p182
        %s304 = sand.u32 %s172, 1
        %s305 = scalar_lea.sflag [#allocation4], %s304
        %s306 = sand.u32 %s172, 1
        %s307 = smul.addr %s306, 8
        %s308 = scalar_lea.vmem [#allocation5], %s307
        %p309 = pneg %p211
        %p310 = pneg %p208
        %s311 = sand.u32 %s198, 1
        %s312 = scalar_lea.sflag [#allocation7], %s311
        %s313 = sand.u32 %s198, 1
        %s314 = smul.addr %s313, 8
        %s315 = scalar_lea.vmem [#allocation6], %s314
        %p316 = scmp.lt.s32.totalorder %s28, 1
        %s317 = scalar_select %p316, %s28, 1
        %s318 = smul.addr %s317, 8
        %s319 = scalar_lea.vmem %s5, %s318
        %v320 = vld [vmem:[%s275] sm:$0xff]
        %v321 = vld [vmem:[%s275 + $0x8] sm:$0xff]
        %v322 = vld [vmem:[%s275 + $0x10] sm:$0xff]
        %v323 = vld [vmem:[%s275 + $0x18] sm:$0xff]
        %v324 = vld [vmem:[%s1] sm:$0xff]
        %v325 = vld [vmem:[%s3] sm:$0xff]
        %v326 = vld [vmem:[%s2] sm:$0xff]
        %v327 = vld [vmem:[%s4] sm:$0xff]
        %329 = vset.pattern.permute.xlu0 0
        %330 = vperm.xlu0 %329, %v326
        %v331 = vpop.permute.xlu0 %330
        %vm333 = vcmask 261120
        %v335 = vsel %vm333, %v324, 0
        %337 = vmatpush.msra.mxu0 0.0
        %338 = vmatpush.msra.mxu0 0.0
        %339 = vmatpush.msra.mxu0 0.0
        %340 = vmatpush.msra.mxu0 0.0
        %341 = vmatpush.msra.mxu0 0.0
        %342 = vmatpush.msra.mxu0 0.0
        %343 = vmatpush.msra.mxu0 0.0
        %344 = vmatpush.msra.mxu0 0.0
        %345 = vmatpush.msra.mxu0 0.0
        %346 = vmatpush.msra.mxu0 0.0
        %347 = vmatpush.msra.mxu0 0.0
        %348 = vmatpush.msra.mxu0 0.0
        %349 = vmatpush.msra.mxu0 %v323
        %350 = vmatpush.msra.mxu0 %v322
        %351 = vmatpush.msra.mxu0 %v321
        %352 = vmatpush.msra.mxu0 %v320
        %353 = vmatmul.f32.gmra.mxu0 %v335
        %v354 = vpop.f32.mrf.mxu0
        %v355 = vadd.f32 %v331, %v354
        %356 = vdwg.mxu0
        %v357 = vtanh.pop %v355
        %358 = vmax.xlane.f32.xlu0 %v357
        %v359 = vpop.xlane.xlu0 %358
        %v360 = vsub.f32 %v357, %v359
        %v361 = vmul.f32 %v360, 1.442695
        %v362 = vpow.pop %v361
        %363 = vadd.xlane.f32.xlu0 %v362
        %v364 = vpop.xlane.xlu0 %363
        %v365 = vrcp.pop %v364
        %v366 = vmul.f32 %v364, %v365
        %v367 = vsub.f32 1.0, %v366
        %v368 = vmul.f32 %v365, %v367
        %v369 = vadd.f32 %v365, %v368
        %vm370 = vweird.f32 %v364
        %vm371 = vweird.f32 %v365
        %vm372 = vmor %vm370, %vm371
        %v373 = vsel %vm372, %v365, %v369
        %v374 = vand.u32 2147483647, %v364
        %vm375 = vcmp.eq.f32.partialorder %v374, 8.507059e+37
        %v376 = vand.u32 %v364, 2147483648
        %v377 = vor.u32 1.1754944e-38, %v376
        %v378 = vsel %vm375, %v377, %v373
        %v379 = vmul.f32 %v362, %v378
        %381 = vset.pattern.permute.xlu0 0
        %382 = vperm.xlu0 %381, %v327
        %v383 = vpop.permute.xlu0 %382
        %v386 = vsel %vm333, %v325, 0
        %388 = vmatpush.msra.mxu0 0.0
        %389 = vmatpush.msra.mxu0 0.0
        %390 = vmatpush.msra.mxu0 0.0
        %391 = vmatpush.msra.mxu0 0.0
        %392 = vmatpush.msra.mxu0 0.0
        %393 = vmatpush.msra.mxu0 0.0
        %394 = vmatpush.msra.mxu0 0.0
        %395 = vmatpush.msra.mxu0 0.0
        %396 = vmatpush.msra.mxu0 0.0
        %397 = vmatpush.msra.mxu0 0.0
        %398 = vmatpush.msra.mxu0 0.0
        %399 = vmatpush.msra.mxu0 0.0
        %400 = vmatpush.msra.mxu0 %v323
        %401 = vmatpush.msra.mxu0 %v322
        %402 = vmatpush.msra.mxu0 %v321
        %403 = vmatpush.msra.mxu0 %v320
        %404 = vmatmul.f32.gmra.mxu0 %v386
        %v405 = vpop.f32.mrf.mxu0
        %v406 = vadd.f32 %v383, %v405
        %407 = vdwg.mxu0
        %v408 = vmul.f32 %v406, %v379
        %409 = vadd.xlane.f32.xlu0 %v408
        %v410 = vpop.xlane.xlu0 %409
        %411 = vst [vmem:[%s315] sm:$0xff] %v379
        %412 = vst [vmem:[%s308] sm:$0xff] %v406
        %vm413 = vcmask 7168
        %414 = vst.msk [vmem:[%s319] sm:$0xff] %vm413, %v410
        %p415 = scmp.lt.s32.totalorder %s28, 1
        %s416 = scalar_select %p415, %s28, 1
        %s417 = smul.addr %s416, 8
        %s418 = scalar_lea.vmem %s5, %s417
        %s419 = sand.u32 %s172, 1
        %s420 = scalar_lea.sflag [#allocation4], %s419
        %s421 = sand.u32 %s172, 1
        %s422 = smul.addr %s421, 8
        %s423 = scalar_lea.vmem [#allocation5], %s422
        %s424 = sand.u32 %s198, 1
        %s425 = scalar_lea.sflag [#allocation7], %s424
        %s426 = sand.u32 %s198, 1
        %s427 = smul.addr %s426, 8
        %s428 = scalar_lea.vmem [#allocation6], %s427
        // Predicated region
        $region45: #{tpu_custom_call.1} parent=39 // pred_check
          %p429 = pneg %p156
        $region46: #{tpu_custom_call.1} parent=39 // pred_check_branch
          %431 = sbr.rel (%p429) target = $region48
        $region47: #{tpu_custom_call.1} parent=39 // pred_region
          _
        $region48: #{tpu_custom_call.1} parent=39 // pred_fallthru
          _
        // Predicated region
        $region49: #{tpu_custom_call.1} parent=39 // pred_check
          %p432 = pneg %p182
        $region50: #{tpu_custom_call.1} parent=39 // pred_check_branch
          %434 = sbr.rel (%p432) target = $region52
        $region51: #{tpu_custom_call.1} parent=39 // pred_region
          %436 = vsyncadd %s420, 0
          %s437 = smul.addr %s28, 8
          %s438 = scalar_lea.hbm %s6, %s437
          %s440 = sshll.u32 %s423, 4
          %s441 = int_to_ptr.vmem [resolvable:$true] %s440
          %s442 = sshll.u32 %s438, 4
          %s443 = int_to_ptr.hbm [resolvable:$true] %s442
          %445 = dma.vmem_to_hbm [thread:$0]  %s441, 128, %s443, %s420
        $region52: #{tpu_custom_call.1} parent=39 // pred_fallthru
          _
        // Predicated region
        $region53: #{tpu_custom_call.1} parent=39 // pred_check
          %p446 = pneg %p208
        $region54: #{tpu_custom_call.1} parent=39 // pred_check_branch
          %448 = sbr.rel (%p446) target = $region56
        $region55: #{tpu_custom_call.1} parent=39 // pred_region
          %450 = vsyncadd %s425, 0
          %s451 = smul.addr %s28, 8
          %s452 = scalar_lea.hbm %s7, %s451
          %s454 = sshll.u32 %s428, 4
          %s455 = int_to_ptr.vmem [resolvable:$true] %s454
          %s456 = sshll.u32 %s452, 4
          %s457 = int_to_ptr.hbm [resolvable:$true] %s456
          %459 = dma.vmem_to_hbm [thread:$0]  %s455, 128, %s457, %s425
        $region56: #{tpu_custom_call.1} parent=39 // pred_fallthru
          _
      $region40: #{tpu_custom_call.1} parent=5 // pred_fallthru
        _
      %p460 = scmp.le.s32.totalorder 2, %s23
      // Predicated region
      $region57: #{tpu_custom_call.1} parent=5 // pred_check
        %p461 = pneg %p460
      $region58: #{tpu_custom_call.1} parent=5 // pred_check_branch
        %463 = sbr.rel (%p461) target = $region60
      $region59: #{tpu_custom_call.1} parent=5 // pred_region
        %s464 = ssub.s32 %s23, 2
        // Predicated region
        $region61: #{tpu_custom_call.1} parent=59 // pred_check
          %p465 = pneg %p162
        $region62: #{tpu_custom_call.1} parent=59 // pred_check_branch
          %467 = sbr.rel (%p465) target = $region64
        $region63: #{tpu_custom_call.1} parent=59 // pred_region
          %p468 = scmp.lt.s32.totalorder %s29, 1
          %s469 = scalar_select %p468, %s29, 1
          %s470 = smul.addr %s469, 8
          %s471 = scalar_lea.vmem %s5, %s470
        $region64: #{tpu_custom_call.1} parent=59 // pred_fallthru
          _
        // Predicated region
        $region65: #{tpu_custom_call.1} parent=59 // pred_check
          %p472 = pneg %p188
        $region66: #{tpu_custom_call.1} parent=59 // pred_check_branch
          %474 = sbr.rel (%p472) target = $region68
        $region67: #{tpu_custom_call.1} parent=59 // pred_region
          %s475 = sand.u32 %s173, 1
          %s476 = scalar_lea.sflag [#allocation4], %s475
          %s477 = sand.u32 %s173, 1
          %s478 = smul.addr %s477, 8
          %s479 = scalar_lea.vmem [#allocation5], %s478
          %481 = dma.done %s476, 128
        $region68: #{tpu_custom_call.1} parent=59 // pred_fallthru
          _
        // Predicated region
        $region69: #{tpu_custom_call.1} parent=59 // pred_check
          %p482 = pneg %p214
        $region70: #{tpu_custom_call.1} parent=59 // pred_check_branch
          %484 = sbr.rel (%p482) target = $region72
        $region71: #{tpu_custom_call.1} parent=59 // pred_region
          %s485 = sand.u32 %s199, 1
          %s486 = scalar_lea.sflag [#allocation7], %s485
          %s487 = sand.u32 %s199, 1
          %s488 = smul.addr %s487, 8
          %s489 = scalar_lea.vmem [#allocation6], %s488
          %491 = dma.done %s486, 128
        $region72: #{tpu_custom_call.1} parent=59 // pred_fallthru
          _
      $region60: #{tpu_custom_call.1} parent=5 // pred_fallthru
        _
    $region6: #{tpu_custom_call.1} parent=1 // loop_footer
      %s27 = sadd.s32 1, %s23
    $region7: #{tpu_custom_call.1} parent=1 // loop_footer_branch
      %22 = sbr.rel target = $region3
    $region8: #{tpu_custom_call.1} parent=1 // loop_exit
      _
    %492 = vsyncpa [#allocation3], 1
    %s493 = scalar_lea.sflag [#allocation3], 1
    %494 = vsyncpa %s493, 1
    %495 = vsyncpa [#allocation4], 1
    %s496 = scalar_lea.sflag [#allocation4], 1
    %497 = vsyncpa %s496, 1
    %498 = vsyncpa [#allocation7], 1
    %s499 = scalar_lea.sflag [#allocation7], 1
    %500 = vsyncpa %s499, 1

</llo_original>
